<compile_context>
chip_gen: v6e
topology: v6e:2x2x1
jax: 0.10.0
libtpu: 0.0.40
codegen_flags: <defaults>
</compile_context>

<pallas_src>
import jax
import jax.numpy as jnp
from jax.experimental import pallas as pl
from jax.experimental.pallas import tpu as pltpu


# ---------------------------------------------------------------------------
# Single fused kernel: collapsed probe projections + relu + encoder + head.
# ---------------------------------------------------------------------------
def probex_fused_kernel(x_ref, m_ref, ew_ref, eb_ref, cw_ref, cb_ref, out_ref):
    # x_ref : (TB, d_H*d_W) f32     m_ref : (d_H*d_W, F) f32
    # ew_ref: (F, r_T)      f32     eb_ref: (1, r_T)     f32
    # cw_ref: (r_T, C)      f32     cb_ref: (1, C)       f32
    # out_ref: (TB, C)      f32
    q = jnp.dot(x_ref[...], m_ref[...], preferred_element_type=jnp.float32)
    q = jnp.maximum(q, 0.0)                                       # (TB, F) lane-dense
    rep = jnp.dot(q, ew_ref[...], preferred_element_type=jnp.float32) + eb_ref[...]
    logits = jnp.dot(rep, cw_ref[...], preferred_element_type=jnp.float32) + cb_ref[...]
    out_ref[...] = logits.astype(out_ref.dtype)


# ---------------------------------------------------------------------------
# Wrapper
# ---------------------------------------------------------------------------
def probex_forward(x, W_probes, W_shared, W_enc, b_enc, W_cls, b_cls, *, block_b=None):
    B, d_H, d_W = x.shape
    r_U = W_probes.shape[1]
    r_V = W_shared.shape[0]
    r_T = W_enc.shape[0]
    C = W_cls.shape[0]
    F = r_U * r_V
    K = d_H * d_W
    assert W_enc.shape[1] == F

    # One-time weight preprocessing (tiny constants, outside the kernel):
    #   q[b,u,v] = sum_{h,w} x[b,h,w] * P[w,u] * V[v,h]
    #   => q_flat = x_flat @ M with M[h*d_W+w, u*r_V+v] = P[w,u] * V[v,h],
    #   which is already in the u-major/v-minor order of PyTorch's
    #   transpose(1,2).reshape(B, -1).
    M = jnp.einsum("wu,vh->hwuv", W_probes, W_shared).reshape(K, F).astype(jnp.float32)
    ew = W_enc.T.astype(jnp.float32)               # (F, r_T)
    cw = W_cls.T.astype(jnp.float32)               # (r_T, C)
    eb = b_enc.reshape(1, r_T).astype(jnp.float32)
    cb = b_cls.reshape(1, C).astype(jnp.float32)

    # Single grid step by default (latency-bound problem); block_b (e.g. B//2
    # on v7x) splits the batch across TensorCores if desired.
    if block_b is None:
        TB = B
    else:
        TB = max(8, min(block_b, B))
        TB = ((TB + 7) // 8) * 8                   # sublane-aligned block
    Bp = ((B + TB - 1) // TB) * TB

    x_flat = x.reshape(B, K).astype(jnp.float32)   # free row-major view
    if Bp != B:
        x_flat = jnp.pad(x_flat, ((0, Bp - B), (0, 0)))

    grid = (Bp // TB,)
    logits = pl.pallas_call(
        probex_fused_kernel,
        out_shape=jax.ShapeDtypeStruct((Bp, C), jnp.float32),
        grid_spec=pltpu.PrefetchScalarGridSpec(
            num_scalar_prefetch=0,
            grid=grid,
            in_specs=[
                pl.BlockSpec((TB, K), lambda i: (i, 0)),
                pl.BlockSpec((K, F), lambda i: (0, 0)),
                pl.BlockSpec((F, r_T), lambda i: (0, 0)),
                pl.BlockSpec((1, r_T), lambda i: (0, 0)),
                pl.BlockSpec((r_T, C), lambda i: (0, 0)),
                pl.BlockSpec((1, C), lambda i: (0, 0)),
            ],
            out_specs=pl.BlockSpec((TB, C), lambda i: (i, 0)),
        ),
        compiler_params=pltpu.CompilerParams(
            dimension_semantics=("parallel",),
            vmem_limit_bytes=32 * 1024 * 1024,
        ),
    )(x_flat, M, ew, eb, cw, cb)

    return logits[:B]


# ---------------------------------------------------------------------------
# Pure-JAX reference (mirrors the PyTorch forward exactly, f32)
# ---------------------------------------------------------------------------
def probex_reference(x, W_probes, W_shared, W_enc, b_enc, W_cls, b_cls):
    pr = jnp.einsum("bhw,wu->bhu", x, W_probes)            # x @ probes.weight
    q = jnp.einsum("bhu,vh->buv", pr, W_shared)            # Linear on transpose(1,2)
    q = jnp.maximum(q, 0.0)
    flat = q.reshape(x.shape[0], -1)
    rep = flat @ W_enc.T + b_enc
    return rep @ W_cls.T + b_cls


if __name__ == "__main__":
    # Small, module-consistent shapes.
    B = 32
    d_H, d_W = 32, 32          # input_shape = (d_H, d_W)
    n_probes = 8               # r_U
    proj_dim = 8               # r_V
    rep_dim = 32               # r_T
    num_classes = 8

    key = jax.random.PRNGKey(0)
    kx, kp, kv, ke, kbe, kc, kbc = jax.random.split(key, 7)

    x = jax.random.normal(kx, (B, d_H, d_W), dtype=jnp.float32)

    # Parameters in PyTorch nn.Linear layout: weight = [out_features, in_features]
    W_probes = 0.05 * jax.random.normal(kp, (d_W, n_probes), dtype=jnp.float32)
    W_shared = 0.05 * jax.random.normal(kv, (proj_dim, d_H), dtype=jnp.float32)
    W_enc = 0.05 * jax.random.normal(ke, (rep_dim, proj_dim * n_probes), dtype=jnp.float32)
    b_enc = 0.05 * jax.random.normal(kbe, (rep_dim,), dtype=jnp.float32)
    W_cls = 0.05 * jax.random.normal(kc, (num_classes, rep_dim), dtype=jnp.float32)
    b_cls = 0.05 * jax.random.normal(kbc, (num_classes,), dtype=jnp.float32)

    fwd = jax.jit(probex_forward)
    logits = jax.block_until_ready(
        fwd(x, W_probes, W_shared, W_enc, b_enc, W_cls, b_cls))

    ref = probex_reference(x, W_probes, W_shared, W_enc, b_enc, W_cls, b_cls)
    assert logits.shape == (B, num_classes)
    # f32 everywhere; only the Kronecker-fused summation order differs from the
    # two-matmul reference -> tight tolerance.
    assert jnp.allclose(logits, ref, atol=1e-3, rtol=1e-3), (
        f"max abs err {jnp.max(jnp.abs(logits - ref))}")

    print("KERNEL_OK")
</pallas_src>

<mosaic_0001>
module attributes {stable_mosaic.version = 11 : i64} {
  func.func @probex_fused_kernel(%arg0: i32, %arg1: memref<32x1024xf32, #tpu.memory_space<vmem>>, %arg2: memref<1024x64xf32, #tpu.memory_space<vmem>>, %arg3: memref<64x32xf32, #tpu.memory_space<vmem>>, %arg4: memref<1x32xf32, #tpu.memory_space<vmem>>, %arg5: memref<32x8xf32, #tpu.memory_space<vmem>>, %arg6: memref<1x8xf32, #tpu.memory_space<vmem>>, %arg7: memref<32x8xf32, #tpu.memory_space<vmem>>) attributes {dimension_semantics = [#tpu.dimension_semantics<parallel>], iteration_bounds = array<i64: 1>, scalar_prefetch = 0 : i64, scratch_operands = 0 : i64, tpu.core_type = #tpu.core_type<tc>, window_params = [{transform_indices = @transform_0, window_bounds = array<i64: 32, 1024>}, {pipeline_mode = #tpu.pipeline_mode<synchronous>, transform_indices = @transform_1, window_bounds = array<i64: 1024, 64>}, {pipeline_mode = #tpu.pipeline_mode<synchronous>, transform_indices = @transform_2, window_bounds = array<i64: 64, 32>}, {pipeline_mode = #tpu.pipeline_mode<synchronous>, transform_indices = @transform_3, window_bounds = array<i64: 1, 32>}, {pipeline_mode = #tpu.pipeline_mode<synchronous>, transform_indices = @transform_4, window_bounds = array<i64: 32, 8>}, {pipeline_mode = #tpu.pipeline_mode<synchronous>, transform_indices = @transform_5, window_bounds = array<i64: 1, 8>}, {transform_indices = @transform_6, window_bounds = array<i64: 32, 8>}]} {
    %c0 = arith.constant 0 : index
    %c0_0 = arith.constant 0 : index
    %0 = vector.load %arg1[%c0, %c0_0] : memref<32x1024xf32, #tpu.memory_space<vmem>>, vector<32x1024xf32>
    %c0_1 = arith.constant 0 : index
    %c0_2 = arith.constant 0 : index
    %1 = vector.load %arg2[%c0_1, %c0_2] : memref<1024x64xf32, #tpu.memory_space<vmem>>, vector<1024x64xf32>
    %cst = arith.constant dense<0.000000e+00> : vector<32x64xf32>
    %2 = tpu.matmul %0, %1, %cst {dimension_numbers = #tpu.dot_dimension_numbers<[1], [0], [0], [1], [0, 0, 1, 1], [], []>} : vector<32x1024xf32>, vector<1024x64xf32>, vector<32x64xf32> -> vector<32x64xf32>
    %cst_3 = arith.constant 0.000000e+00 : f32
    %3 = vector.broadcast %cst_3 : f32 to vector<32x64xf32>
    %4 = arith.maximumf %2, %3 : vector<32x64xf32>
    %c0_4 = arith.constant 0 : index
    %c0_5 = arith.constant 0 : index
    %5 = vector.load %arg3[%c0_4, %c0_5] : memref<64x32xf32, #tpu.memory_space<vmem>>, vector<64x32xf32>
    %cst_6 = arith.constant dense<0.000000e+00> : vector<32x32xf32>
    %6 = tpu.matmul %4, %5, %cst_6 {dimension_numbers = #tpu.dot_dimension_numbers<[1], [0], [0], [1], [0, 0, 1, 1], [], []>} : vector<32x64xf32>, vector<64x32xf32>, vector<32x32xf32> -> vector<32x32xf32>
    %c0_7 = arith.constant 0 : index
    %c0_8 = arith.constant 0 : index
    %7 = vector.load %arg4[%c0_7, %c0_8] : memref<1x32xf32, #tpu.memory_space<vmem>>, vector<1x32xf32>
    %8 = vector.broadcast %7 : vector<1x32xf32> to vector<32x32xf32>
    %9 = arith.addf %6, %8 : vector<32x32xf32>
    %c0_9 = arith.constant 0 : index
    %c0_10 = arith.constant 0 : index
    %10 = vector.load %arg5[%c0_9, %c0_10] : memref<32x8xf32, #tpu.memory_space<vmem>>, vector<32x8xf32>
    %cst_11 = arith.constant dense<0.000000e+00> : vector<32x8xf32>
    %11 = tpu.matmul %9, %10, %cst_11 {dimension_numbers = #tpu.dot_dimension_numbers<[1], [0], [0], [1], [0, 0, 1, 1], [], []>} : vector<32x32xf32>, vector<32x8xf32>, vector<32x8xf32> -> vector<32x8xf32>
    %c0_12 = arith.constant 0 : index
    %c0_13 = arith.constant 0 : index
    %12 = vector.load %arg6[%c0_12, %c0_13] : memref<1x8xf32, #tpu.memory_space<vmem>>, vector<1x8xf32>
    %13 = vector.broadcast %12 : vector<1x8xf32> to vector<32x8xf32>
    %14 = arith.addf %11, %13 : vector<32x8xf32>
    %c0_14 = arith.constant 0 : index
    %c0_15 = arith.constant 0 : index
    %15 = vector.load %arg7[%c0_14, %c0_15] : memref<32x8xf32, #tpu.memory_space<vmem>>, vector<32x8xf32>
    tpu.vector_store %arg7[%c0_14, %c0_15], %14 {strides = array<i32>} : memref<32x8xf32, #tpu.memory_space<vmem>>, vector<32x8xf32>,
    return
  }
  func.func @transform_0(%arg0: i32) -> (i32, i32) {
    %c0_i32 = arith.constant 0 : i32
    %c0_i32_0 = arith.constant 0 : i32
    return %arg0, %c0_i32 : i32, i32
  }
  func.func @transform_1(%arg0: i32) -> (i32, i32) {
    %c0_i32 = arith.constant 0 : i32
    %c0_i32_0 = arith.constant 0 : i32
    %c0_i32_1 = arith.constant 0 : i32
    return %c0_i32, %c0_i32_0 : i32, i32
  }
  func.func @transform_2(%arg0: i32) -> (i32, i32) {
    %c0_i32 = arith.constant 0 : i32
    %c0_i32_0 = arith.constant 0 : i32
    %c0_i32_1 = arith.constant 0 : i32
    return %c0_i32, %c0_i32_0 : i32, i32
  }
  func.func @transform_3(%arg0: i32) -> (i32, i32) {
    %c0_i32 = arith.constant 0 : i32
    %c0_i32_0 = arith.constant 0 : i32
    %c0_i32_1 = arith.constant 0 : i32
    return %c0_i32, %c0_i32_0 : i32, i32
  }
  func.func @transform_4(%arg0: i32) -> (i32, i32) {
    %c0_i32 = arith.constant 0 : i32
    %c0_i32_0 = arith.constant 0 : i32
    %c0_i32_1 = arith.constant 0 : i32
    return %c0_i32, %c0_i32_0 : i32, i32
  }
  func.func @transform_5(%arg0: i32) -> (i32, i32) {
    %c0_i32 = arith.constant 0 : i32
    %c0_i32_0 = arith.constant 0 : i32
    %c0_i32_1 = arith.constant 0 : i32
    return %c0_i32, %c0_i32_0 : i32, i32
  }
  func.func @transform_6(%arg0: i32) -> (i32, i32) {
    %c0_i32 = arith.constant 0 : i32
    %c0_i32_0 = arith.constant 0 : i32
    return %arg0, %c0_i32 : i32, i32
  }
}

</mosaic_0001>

<llo_original>
// kernel: probex_forward.1
$region0: #{probex_forward.1}
  #allocation0 [shape = 'u32[]', space=smem, size = 0x4, offset = 0x4, fixed_abs, tag = 'smem constant byte address 0x4 - core index']
  #allocation1 [shape = 'u32[144,128]{1,0:T(1,128)}', space=vmem, size = 0x12000, scoped, tag = 'internal scratch']
  %s0 = inlined_call_operand.vmem [shape: f32[32,1024], index: 0, kind: input, shape index: {}]
  %s1 = inlined_call_operand.vmem [shape: f32[1024,64], index: 1, kind: input, shape index: {}]
  %s2 = inlined_call_operand.vmem [shape: f32[64,32], index: 2, kind: input, shape index: {}]
  %s3 = inlined_call_operand.vmem [shape: f32[1,32], index: 3, kind: input, shape index: {}]
  %s4 = inlined_call_operand.vmem [shape: f32[32,8], index: 4, kind: input, shape index: {}]
  %s5 = inlined_call_operand.vmem [shape: f32[1,8], index: 5, kind: input, shape index: {}]
  %s6 = inlined_call_operand.vmem [shape: f32[32,8], index: 6, kind: output, shape index: {}]
  %s7 = sld [smem:[#allocation0]]
  $region34: #{probex_forward.1} parent=0
    _
  %s9 = ssub.s32 1, %s7
  %s10 = scalar_select 0, %s9, %s7
  // Predicated region
  $region2: #{probex_forward.1} parent=0 // pred_check
    _
  $region3: #{probex_forward.1} parent=0 // pred_check_branch
    %12 = sbr.rel (0) target = $region5
  $region4: #{probex_forward.1} parent=0 // pred_region
    _
  $region5: #{probex_forward.1} parent=0 // pred_fallthru
    _
  // Predicated region
  $region6: #{probex_forward.1} parent=0 // pred_check
    _
  $region7: #{probex_forward.1} parent=0 // pred_check_branch
    %14 = sbr.rel (0) target = $region9
  $region8: #{probex_forward.1} parent=0 // pred_region
    _
  $region9: #{probex_forward.1} parent=0 // pred_fallthru
    _
  // Predicated region
  $region10: #{probex_forward.1} parent=0 // pred_check
    _
  $region11: #{probex_forward.1} parent=0 // pred_check_branch
    %16 = sbr.rel (0) target = $region13
  $region12: #{probex_forward.1} parent=0 // pred_region
    _
  $region13: #{probex_forward.1} parent=0 // pred_fallthru
    _
  // Predicated region
  $region14: #{probex_forward.1} parent=0 // pred_check
    _
  $region15: #{probex_forward.1} parent=0 // pred_check_branch
    %18 = sbr.rel (0) target = $region17
  $region16: #{probex_forward.1} parent=0 // pred_region
    _
  $region17: #{probex_forward.1} parent=0 // pred_fallthru
    _
  // Predicated region
  $region18: #{probex_forward.1} parent=0 // pred_check
    _
  $region19: #{probex_forward.1} parent=0 // pred_check_branch
    %20 = sbr.rel (0) target = $region21
  $region20: #{probex_forward.1} parent=0 // pred_region
    _
  $region21: #{probex_forward.1} parent=0 // pred_fallthru
    _
  // Predicated region
  $region22: #{probex_forward.1} parent=0 // pred_check
    _
  $region23: #{probex_forward.1} parent=0 // pred_check_branch
    %22 = sbr.rel (0) target = $region25
  $region24: #{probex_forward.1} parent=0 // pred_region
    _
  $region25: #{probex_forward.1} parent=0 // pred_fallthru
    _
  %v23 = vld [vmem:[%s0] sm:$0xff]
  %v24 = vld [vmem:[%s0 + $0x8] sm:$0xff]
  %v25 = vld [vmem:[%s0 + $0x10] sm:$0xff]
  %v26 = vld [vmem:[%s0 + $0x18] sm:$0xff]
  %v27 = vld [vmem:[%s0 + $0x20] sm:$0xff]
  %v28 = vld [vmem:[%s0 + $0x28] sm:$0xff]
  %v29 = vld [vmem:[%s0 + $0x30] sm:$0xff]
  %v30 = vld [vmem:[%s0 + $0x38] sm:$0xff]
  %v31 = vld [vmem:[%s0 + $0x40] sm:$0xff]
  %v32 = vld [vmem:[%s0 + $0x48] sm:$0xff]
  %v33 = vld [vmem:[%s0 + $0x50] sm:$0xff]
  %v34 = vld [vmem:[%s0 + $0x58] sm:$0xff]
  %v35 = vld [vmem:[%s0 + $0x60] sm:$0xff]
  %v36 = vld [vmem:[%s0 + $0x68] sm:$0xff]
  %v37 = vld [vmem:[%s0 + $0x70] sm:$0xff]
  %v38 = vld [vmem:[%s0 + $0x78] sm:$0xff]
  %v39 = vld [vmem:[%s0 + $0x80] sm:$0xff]
  %v40 = vld [vmem:[%s0 + $0x88] sm:$0xff]
  %v41 = vld [vmem:[%s0 + $0x90] sm:$0xff]
  %v42 = vld [vmem:[%s0 + $0x98] sm:$0xff]
  %v43 = vld [vmem:[%s0 + $0xa0] sm:$0xff]
  %v44 = vld [vmem:[%s0 + $0xa8] sm:$0xff]
  %v45 = vld [vmem:[%s0 + $0xb0] sm:$0xff]
  %v46 = vld [vmem:[%s0 + $0xb8] sm:$0xff]
  %v47 = vld [vmem:[%s0 + $0xc0] sm:$0xff]
  %v48 = vld [vmem:[%s0 + $0xc8] sm:$0xff]
  %v49 = vld [vmem:[%s0 + $0xd0] sm:$0xff]
  %v50 = vld [vmem:[%s0 + $0xd8] sm:$0xff]
  %v51 = vld [vmem:[%s0 + $0xe0] sm:$0xff]
  %v52 = vld [vmem:[%s0 + $0xe8] sm:$0xff]
  %v53 = vld [vmem:[%s0 + $0xf0] sm:$0xff]
  %v54 = vld [vmem:[%s0 + $0xf8] sm:$0xff]
  %v55 = vld [vmem:[%s1] sm:$0xff]
  %v56 = vld [vmem:[%s1 + $0x8] sm:$0xff]
  %v57 = vld [vmem:[%s1 + $0x10] sm:$0xff]
  %v58 = vld [vmem:[%s1 + $0x18] sm:$0xff]
  %v59 = vld [vmem:[%s1 + $0x20] sm:$0xff]
  %v60 = vld [vmem:[%s1 + $0x28] sm:$0xff]
  %v61 = vld [vmem:[%s1 + $0x30] sm:$0xff]
  %v62 = vld [vmem:[%s1 + $0x38] sm:$0xff]
  %v63 = vld [vmem:[%s1 + $0x40] sm:$0xff]
  %v64 = vld [vmem:[%s1 + $0x48] sm:$0xff]
  %v65 = vld [vmem:[%s1 + $0x50] sm:$0xff]
  %v66 = vld [vmem:[%s1 + $0x58] sm:$0xff]
  %v67 = vld [vmem:[%s1 + $0x60] sm:$0xff]
  %v68 = vld [vmem:[%s1 + $0x68] sm:$0xff]
  %v69 = vld [vmem:[%s1 + $0x70] sm:$0xff]
  %v70 = vld [vmem:[%s1 + $0x78] sm:$0xff]
  %v71 = vld [vmem:[%s1 + $0x80] sm:$0xff]
  %v72 = vld [vmem:[%s1 + $0x88] sm:$0xff]
  %v73 = vld [vmem:[%s1 + $0x90] sm:$0xff]
  %v74 = vld [vmem:[%s1 + $0x98] sm:$0xff]
  %v75 = vld [vmem:[%s1 + $0xa0] sm:$0xff]
  %v76 = vld [vmem:[%s1 + $0xa8] sm:$0xff]
  %v77 = vld [vmem:[%s1 + $0xb0] sm:$0xff]
  %v78 = vld [vmem:[%s1 + $0xb8] sm:$0xff]
  %v79 = vld [vmem:[%s1 + $0xc0] sm:$0xff]
  %v80 = vld [vmem:[%s1 + $0xc8] sm:$0xff]
  %v81 = vld [vmem:[%s1 + $0xd0] sm:$0xff]
  %v82 = vld [vmem:[%s1 + $0xd8] sm:$0xff]
  %v83 = vld [vmem:[%s1 + $0xe0] sm:$0xff]
  %v84 = vld [vmem:[%s1 + $0xe8] sm:$0xff]
  %v85 = vld [vmem:[%s1 + $0xf0] sm:$0xff]
  %v86 = vld [vmem:[%s1 + $0xf8] sm:$0xff]
  %v87 = vld [vmem:[%s1 + $0x100] sm:$0xff]
  %v88 = vld [vmem:[%s1 + $0x108] sm:$0xff]
  %v89 = vld [vmem:[%s1 + $0x110] sm:$0xff]
  %v90 = vld [vmem:[%s1 + $0x118] sm:$0xff]
  %v91 = vld [vmem:[%s1 + $0x120] sm:$0xff]
  %v92 = vld [vmem:[%s1 + $0x128] sm:$0xff]
  %v93 = vld [vmem:[%s1 + $0x130] sm:$0xff]
  %v94 = vld [vmem:[%s1 + $0x138] sm:$0xff]
  %v95 = vld [vmem:[%s1 + $0x140] sm:$0xff]
  %v96 = vld [vmem:[%s1 + $0x148] sm:$0xff]
  %v97 = vld [vmem:[%s1 + $0x150] sm:$0xff]
  %v98 = vld [vmem:[%s1 + $0x158] sm:$0xff]
  %v99 = vld [vmem:[%s1 + $0x160] sm:$0xff]
  %v100 = vld [vmem:[%s1 + $0x168] sm:$0xff]
  %v101 = vld [vmem:[%s1 + $0x170] sm:$0xff]
  %v102 = vld [vmem:[%s1 + $0x178] sm:$0xff]
  %v103 = vld [vmem:[%s1 + $0x180] sm:$0xff]
  %v104 = vld [vmem:[%s1 + $0x188] sm:$0xff]
  %v105 = vld [vmem:[%s1 + $0x190] sm:$0xff]
  %v106 = vld [vmem:[%s1 + $0x198] sm:$0xff]
  %v107 = vld [vmem:[%s1 + $0x1a0] sm:$0xff]
  %v108 = vld [vmem:[%s1 + $0x1a8] sm:$0xff]
  %v109 = vld [vmem:[%s1 + $0x1b0] sm:$0xff]
  %v110 = vld [vmem:[%s1 + $0x1b8] sm:$0xff]
  %v111 = vld [vmem:[%s1 + $0x1c0] sm:$0xff]
  %v112 = vld [vmem:[%s1 + $0x1c8] sm:$0xff]
  %v113 = vld [vmem:[%s1 + $0x1d0] sm:$0xff]
  %v114 = vld [vmem:[%s1 + $0x1d8] sm:$0xff]
  %v115 = vld [vmem:[%s1 + $0x1e0] sm:$0xff]
  %v116 = vld [vmem:[%s1 + $0x1e8] sm:$0xff]
  %v117 = vld [vmem:[%s1 + $0x1f0] sm:$0xff]
  %v118 = vld [vmem:[%s1 + $0x1f8] sm:$0xff]
  %v119 = vld [vmem:[%s1 + $0x200] sm:$0xff]
  %v120 = vld [vmem:[%s1 + $0x208] sm:$0xff]
  %v121 = vld [vmem:[%s1 + $0x210] sm:$0xff]
  %v122 = vld [vmem:[%s1 + $0x218] sm:$0xff]
  %v123 = vld [vmem:[%s1 + $0x220] sm:$0xff]
  %v124 = vld [vmem:[%s1 + $0x228] sm:$0xff]
  %v125 = vld [vmem:[%s1 + $0x230] sm:$0xff]
  %v126 = vld [vmem:[%s1 + $0x238] sm:$0xff]
  %v127 = vld [vmem:[%s1 + $0x240] sm:$0xff]
  %v128 = vld [vmem:[%s1 + $0x248] sm:$0xff]
  %v129 = vld [vmem:[%s1 + $0x250] sm:$0xff]
  %v130 = vld [vmem:[%s1 + $0x258] sm:$0xff]
  %v131 = vld [vmem:[%s1 + $0x260] sm:$0xff]
  %v132 = vld [vmem:[%s1 + $0x268] sm:$0xff]
  %v133 = vld [vmem:[%s1 + $0x270] sm:$0xff]
  %v134 = vld [vmem:[%s1 + $0x278] sm:$0xff]
  %v135 = vld [vmem:[%s1 + $0x280] sm:$0xff]
  %v136 = vld [vmem:[%s1 + $0x288] sm:$0xff]
  %v137 = vld [vmem:[%s1 + $0x290] sm:$0xff]
  %v138 = vld [vmem:[%s1 + $0x298] sm:$0xff]
  %v139 = vld [vmem:[%s1 + $0x2a0] sm:$0xff]
  %v140 = vld [vmem:[%s1 + $0x2a8] sm:$0xff]
  %v141 = vld [vmem:[%s1 + $0x2b0] sm:$0xff]
  %v142 = vld [vmem:[%s1 + $0x2b8] sm:$0xff]
  %v143 = vld [vmem:[%s1 + $0x2c0] sm:$0xff]
  %v144 = vld [vmem:[%s1 + $0x2c8] sm:$0xff]
  %v145 = vld [vmem:[%s1 + $0x2d0] sm:$0xff]
  %v146 = vld [vmem:[%s1 + $0x2d8] sm:$0xff]
  %v147 = vld [vmem:[%s1 + $0x2e0] sm:$0xff]
  %v148 = vld [vmem:[%s1 + $0x2e8] sm:$0xff]
  %v149 = vld [vmem:[%s1 + $0x2f0] sm:$0xff]
  %v150 = vld [vmem:[%s1 + $0x2f8] sm:$0xff]
  %v151 = vld [vmem:[%s1 + $0x300] sm:$0xff]
  %v152 = vld [vmem:[%s1 + $0x308] sm:$0xff]
  %v153 = vld [vmem:[%s1 + $0x310] sm:$0xff]
  %v154 = vld [vmem:[%s1 + $0x318] sm:$0xff]
  %v155 = vld [vmem:[%s1 + $0x320] sm:$0xff]
  %v156 = vld [vmem:[%s1 + $0x328] sm:$0xff]
  %v157 = vld [vmem:[%s1 + $0x330] sm:$0xff]
  %v158 = vld [vmem:[%s1 + $0x338] sm:$0xff]
  %v159 = vld [vmem:[%s1 + $0x340] sm:$0xff]
  %v160 = vld [vmem:[%s1 + $0x348] sm:$0xff]
  %v161 = vld [vmem:[%s1 + $0x350] sm:$0xff]
  %v162 = vld [vmem:[%s1 + $0x358] sm:$0xff]
  %v163 = vld [vmem:[%s1 + $0x360] sm:$0xff]
  %v164 = vld [vmem:[%s1 + $0x368] sm:$0xff]
  %v165 = vld [vmem:[%s1 + $0x370] sm:$0xff]
  %v166 = vld [vmem:[%s1 + $0x378] sm:$0xff]
  %v167 = vld [vmem:[%s1 + $0x380] sm:$0xff]
  %v168 = vld [vmem:[%s1 + $0x388] sm:$0xff]
  %v169 = vld [vmem:[%s1 + $0x390] sm:$0xff]
  %v170 = vld [vmem:[%s1 + $0x398] sm:$0xff]
  %v171 = vld [vmem:[%s1 + $0x3a0] sm:$0xff]
  %v172 = vld [vmem:[%s1 + $0x3a8] sm:$0xff]
  %v173 = vld [vmem:[%s1 + $0x3b0] sm:$0xff]
  %v174 = vld [vmem:[%s1 + $0x3b8] sm:$0xff]
  %v175 = vld [vmem:[%s1 + $0x3c0] sm:$0xff]
  %v176 = vld [vmem:[%s1 + $0x3c8] sm:$0xff]
  %v177 = vld [vmem:[%s1 + $0x3d0] sm:$0xff]
  %v178 = vld [vmem:[%s1 + $0x3d8] sm:$0xff]
  %v179 = vld [vmem:[%s1 + $0x3e0] sm:$0xff]
  %v180 = vld [vmem:[%s1 + $0x3e8] sm:$0xff]
  %v181 = vld [vmem:[%s1 + $0x3f0] sm:$0xff]
  %v182 = vld [vmem:[%s1 + $0x3f8] sm:$0xff]
  %183 = vmatprep.subr.mxu0 0.0
  %184 = vmatpush1.msra.mxu0 %v70
  %185 = vmatprep.subr.mxu0 0.0
  %186 = vmatpush1.msra.mxu0 %v69
  %187 = vmatprep.subr.mxu0 0.0
  %188 = vmatpush1.msra.mxu0 %v68
  %189 = vmatprep.subr.mxu0 0.0
  %190 = vmatpush1.msra.mxu0 %v67
  %191 = vmatprep.subr.mxu0 0.0
  %192 = vmatpush1.msra.mxu0 %v66
  %193 = vmatprep.subr.mxu0 0.0
  %194 = vmatpush1.msra.mxu0 %v65
  %195 = vmatprep.subr.mxu0 0.0
  %196 = vmatpush1.msra.mxu0 %v64
  %197 = vmatprep.subr.mxu0 0.0
  %198 = vmatpush1.msra.mxu0 %v63
  %199 = vmatprep.subr.mxu0 0.0
  %200 = vmatpush1.msra.mxu0 %v62
  %201 = vmatprep.subr.mxu0 0.0
  %202 = vmatpush1.msra.mxu0 %v61
  %203 = vmatprep.subr.mxu0 0.0
  %204 = vmatpush1.msra.mxu0 %v60
  %205 = vmatprep.subr.mxu0 0.0
  %206 = vmatpush1.msra.mxu0 %v59
  %207 = vmatprep.subr.mxu0 0.0
  %208 = vmatpush1.msra.mxu0 %v58
  %209 = vmatprep.subr.mxu0 0.0
  %210 = vmatpush1.msra.mxu0 %v57
  %211 = vmatprep.subr.mxu0 0.0
  %212 = vmatpush1.msra.mxu0 %v56
  %213 = vmatprep.subr.mxu0 0.0
  %214 = vmatpush1.msra.mxu0 %v55
  %215 = vmatprep.subr.mxu0 0.0
  %216 = vmatpush2.msra.mxu0 %v86
  %217 = vmatprep.subr.mxu0 0.0
  %218 = vmatpush2.msra.mxu0 %v85
  %219 = vmatprep.subr.mxu0 0.0
  %220 = vmatpush2.msra.mxu0 %v84
  %221 = vmatprep.subr.mxu0 0.0
  %222 = vmatpush2.msra.mxu0 %v83
  %223 = vmatprep.subr.mxu0 0.0
  %224 = vmatpush2.msra.mxu0 %v82
  %225 = vmatprep.subr.mxu0 0.0
  %226 = vmatpush2.msra.mxu0 %v81
  %227 = vmatprep.subr.mxu0 0.0
  %228 = vmatpush2.msra.mxu0 %v80
  %229 = vmatprep.subr.mxu0 0.0
  %230 = vmatpush2.msra.mxu0 %v79
  %231 = vmatprep.subr.mxu0 0.0
  %232 = vmatpush2.msra.mxu0 %v78
  %233 = vmatprep.subr.mxu0 0.0
  %234 = vmatpush2.msra.mxu0 %v77
  %235 = vmatprep.subr.mxu0 0.0
  %236 = vmatpush2.msra.mxu0 %v76
  %237 = vmatprep.subr.mxu0 0.0
  %238 = vmatpush2.msra.mxu0 %v75
  %239 = vmatprep.subr.mxu0 0.0
  %240 = vmatpush2.msra.mxu0 %v74
  %241 = vmatprep.subr.mxu0 0.0
  %242 = vmatpush2.msra.mxu0 %v73
  %243 = vmatprep.subr.mxu0 0.0
  %244 = vmatpush2.msra.mxu0 %v72
  %245 = vmatprep.subr.mxu0 0.0
  %246 = vmatpush2.msra.mxu0 %v71
  %247 = vmatprep.mubr.f32.mxu0 %v24
  %248 = vmatmul.mubr.f32.gmra.mxu0 %v23
  %v249 = vpop.f32.mrf.mxu0
  %v250 = vadd.f32 0.0, %v249
  %v251 = vpop.f32.mrf.mxu0
  %252 = vmatprep.mubr.f32.mxu0 %v32
  %253 = vmatmul.mubr.f32.gmra.mxu0 %v31
  %v254 = vpop.f32.mrf.mxu0
  %v255 = vadd.f32 0.0, %v254
  %v256 = vpop.f32.mrf.mxu0
  %257 = vmatprep.mubr.f32.mxu0 %v40
  %258 = vmatmul.mubr.f32.gmra.mxu0 %v39
  %v259 = vpop.f32.mrf.mxu0
  %v260 = vadd.f32 0.0, %v259
  %v261 = vpop.f32.mrf.mxu0
  %262 = vmatprep.mubr.f32.mxu0 %v48
  %263 = vmatmul.mubr.f32.gmra.mxu0 %v47
  %v264 = vpop.f32.mrf.mxu0
  %v265 = vadd.f32 0.0, %v264
  %v266 = vpop.f32.mrf.mxu0
  %267 = vdwg.mxu0
  %268 = vmatprep.subr.mxu0 0.0
  %269 = vmatpush1.msra.mxu0 %v102
  %270 = vmatprep.subr.mxu0 0.0
  %271 = vmatpush1.msra.mxu0 %v101
  %272 = vmatprep.subr.mxu0 0.0
  %273 = vmatpush1.msra.mxu0 %v100
  %274 = vmatprep.subr.mxu0 0.0
  %275 = vmatpush1.msra.mxu0 %v99
  %276 = vmatprep.subr.mxu0 0.0
  %277 = vmatpush1.msra.mxu0 %v98
  %278 = vmatprep.subr.mxu0 0.0
  %279 = vmatpush1.msra.mxu0 %v97
  %280 = vmatprep.subr.mxu0 0.0
  %281 = vmatpush1.msra.mxu0 %v96
  %282 = vmatprep.subr.mxu0 0.0
  %283 = vmatpush1.msra.mxu0 %v95
  %284 = vmatprep.subr.mxu0 0.0
  %285 = vmatpush1.msra.mxu0 %v94
  %286 = vmatprep.subr.mxu0 0.0
  %287 = vmatpush1.msra.mxu0 %v93
  %288 = vmatprep.subr.mxu0 0.0
  %289 = vmatpush1.msra.mxu0 %v92
  %290 = vmatprep.subr.mxu0 0.0
  %291 = vmatpush1.msra.mxu0 %v91
  %292 = vmatprep.subr.mxu0 0.0
  %293 = vmatpush1.msra.mxu0 %v90
  %294 = vmatprep.subr.mxu0 0.0
  %295 = vmatpush1.msra.mxu0 %v89
  %296 = vmatprep.subr.mxu0 0.0
  %297 = vmatpush1.msra.mxu0 %v88
  %298 = vmatprep.subr.mxu0 0.0
  %299 = vmatpush1.msra.mxu0 %v87
  %300 = vmatprep.subr.mxu0 0.0
  %301 = vmatpush2.msra.mxu0 %v118
  %302 = vmatprep.subr.mxu0 0.0
  %303 = vmatpush2.msra.mxu0 %v117
  %304 = vmatprep.subr.mxu0 0.0
  %305 = vmatpush2.msra.mxu0 %v116
  %306 = vmatprep.subr.mxu0 0.0
  %307 = vmatpush2.msra.mxu0 %v115
  %308 = vmatprep.subr.mxu0 0.0
  %309 = vmatpush2.msra.mxu0 %v114
  %310 = vmatprep.subr.mxu0 0.0
  %311 = vmatpush2.msra.mxu0 %v113
  %312 = vmatprep.subr.mxu0 0.0
  %313 = vmatpush2.msra.mxu0 %v112
  %314 = vmatprep.subr.mxu0 0.0
  %315 = vmatpush2.msra.mxu0 %v111
  %316 = vmatprep.subr.mxu0 0.0
  %317 = vmatpush2.msra.mxu0 %v110
  %318 = vmatprep.subr.mxu0 0.0
  %319 = vmatpush2.msra.mxu0 %v109
  %320 = vmatprep.subr.mxu0 0.0
  %321 = vmatpush2.msra.mxu0 %v108
  %322 = vmatprep.subr.mxu0 0.0
  %323 = vmatpush2.msra.mxu0 %v107
  %324 = vmatprep.subr.mxu0 0.0
  %325 = vmatpush2.msra.mxu0 %v106
  %326 = vmatprep.subr.mxu0 0.0
  %327 = vmatpush2.msra.mxu0 %v105
  %328 = vmatprep.subr.mxu0 0.0
  %329 = vmatpush2.msra.mxu0 %v104
  %330 = vmatprep.subr.mxu0 0.0
  %331 = vmatpush2.msra.mxu0 %v103
  %332 = vmatprep.mubr.f32.mxu0 %v26
  %333 = vmatmul.mubr.f32.gmra.mxu0 %v25
  %v334 = vpop.f32.mrf.mxu0
  %v335 = vadd.f32 %v250, %v334
  %v336 = vpop.f32.mrf.mxu0
  %337 = vmatprep.mubr.f32.mxu0 %v34
  %338 = vmatmul.mubr.f32.gmra.mxu0 %v33
  %v339 = vpop.f32.mrf.mxu0
  %v340 = vadd.f32 %v255, %v339
  %v341 = vpop.f32.mrf.mxu0
  %342 = vmatprep.mubr.f32.mxu0 %v42
  %343 = vmatmul.mubr.f32.gmra.mxu0 %v41
  %v344 = vpop.f32.mrf.mxu0
  %v345 = vadd.f32 %v260, %v344
  %v346 = vpop.f32.mrf.mxu0
  %347 = vmatprep.mubr.f32.mxu0 %v50
  %348 = vmatmul.mubr.f32.gmra.mxu0 %v49
  %v349 = vpop.f32.mrf.mxu0
  %v350 = vadd.f32 %v265, %v349
  %v351 = vpop.f32.mrf.mxu0
  %352 = vdwg.mxu0
  %353 = vmatprep.subr.mxu0 0.0
  %354 = vmatpush1.msra.mxu0 %v134
  %355 = vmatprep.subr.mxu0 0.0
  %356 = vmatpush1.msra.mxu0 %v133
  %357 = vmatprep.subr.mxu0 0.0
  %358 = vmatpush1.msra.mxu0 %v132
  %359 = vmatprep.subr.mxu0 0.0
  %360 = vmatpush1.msra.mxu0 %v131
  %361 = vmatprep.subr.mxu0 0.0
  %362 = vmatpush1.msra.mxu0 %v130
  %363 = vmatprep.subr.mxu0 0.0
  %364 = vmatpush1.msra.mxu0 %v129
  %365 = vmatprep.subr.mxu0 0.0
  %366 = vmatpush1.msra.mxu0 %v128
  %367 = vmatprep.subr.mxu0 0.0
  %368 = vmatpush1.msra.mxu0 %v127
  %369 = vmatprep.subr.mxu0 0.0
  %370 = vmatpush1.msra.mxu0 %v126
  %371 = vmatprep.subr.mxu0 0.0
  %372 = vmatpush1.msra.mxu0 %v125
  %373 = vmatprep.subr.mxu0 0.0
  %374 = vmatpush1.msra.mxu0 %v124
  %375 = vmatprep.subr.mxu0 0.0
  %376 = vmatpush1.msra.mxu0 %v123
  %377 = vmatprep.subr.mxu0 0.0
  %378 = vmatpush1.msra.mxu0 %v122
  %379 = vmatprep.subr.mxu0 0.0
  %380 = vmatpush1.msra.mxu0 %v121
  %381 = vmatprep.subr.mxu0 0.0
  %382 = vmatpush1.msra.mxu0 %v120
  %383 = vmatprep.subr.mxu0 0.0
  %384 = vmatpush1.msra.mxu0 %v119
  %385 = vmatprep.subr.mxu0 0.0
  %386 = vmatpush2.msra.mxu0 %v150
  %387 = vmatprep.subr.mxu0 0.0
  %388 = vmatpush2.msra.mxu0 %v149
  %389 = vmatprep.subr.mxu0 0.0
  %390 = vmatpush2.msra.mxu0 %v148
  %391 = vmatprep.subr.mxu0 0.0
  %392 = vmatpush2.msra.mxu0 %v147
  %393 = vmatprep.subr.mxu0 0.0
  %394 = vmatpush2.msra.mxu0 %v146
  %395 = vmatprep.subr.mxu0 0.0
  %396 = vmatpush2.msra.mxu0 %v145
  %397 = vmatprep.subr.mxu0 0.0
  %398 = vmatpush2.msra.mxu0 %v144
  %399 = vmatprep.subr.mxu0 0.0
  %400 = vmatpush2.msra.mxu0 %v143
  %401 = vmatprep.subr.mxu0 0.0
  %402 = vmatpush2.msra.mxu0 %v142
  %403 = vmatprep.subr.mxu0 0.0
  %404 = vmatpush2.msra.mxu0 %v141
  %405 = vmatprep.subr.mxu0 0.0
  %406 = vmatpush2.msra.mxu0 %v140
  %407 = vmatprep.subr.mxu0 0.0
  %408 = vmatpush2.msra.mxu0 %v139
  %409 = vmatprep.subr.mxu0 0.0
  %410 = vmatpush2.msra.mxu0 %v138
  %411 = vmatprep.subr.mxu0 0.0
  %412 = vmatpush2.msra.mxu0 %v137
  %413 = vmatprep.subr.mxu0 0.0
  %414 = vmatpush2.msra.mxu0 %v136
  %415 = vmatprep.subr.mxu0 0.0
  %416 = vmatpush2.msra.mxu0 %v135
  %417 = vmatprep.mubr.f32.mxu0 %v28
  %418 = vmatmul.mubr.f32.gmra.mxu0 %v27
  %v419 = vpop.f32.mrf.mxu0
  %v420 = vadd.f32 %v335, %v419
  %v421 = vpop.f32.mrf.mxu0
  %422 = vmatprep.mubr.f32.mxu0 %v36
  %423 = vmatmul.mubr.f32.gmra.mxu0 %v35
  %v424 = vpop.f32.mrf.mxu0
  %v425 = vadd.f32 %v340, %v424
  %v426 = vpop.f32.mrf.mxu0
  %427 = vmatprep.mubr.f32.mxu0 %v44
  %428 = vmatmul.mubr.f32.gmra.mxu0 %v43
  %v429 = vpop.f32.mrf.mxu0
  %v430 = vadd.f32 %v345, %v429
  %v431 = vpop.f32.mrf.mxu0
  %432 = vmatprep.mubr.f32.mxu0 %v52
  %433 = vmatmul.mubr.f32.gmra.mxu0 %v51
  %v434 = vpop.f32.mrf.mxu0
  %v435 = vadd.f32 %v350, %v434
  %v436 = vpop.f32.mrf.mxu0
  %437 = vdwg.mxu0
  %438 = vmatprep.subr.mxu0 0.0
  %439 = vmatpush1.msra.mxu0 %v166
  %440 = vmatprep.subr.mxu0 0.0
  %441 = vmatpush1.msra.mxu0 %v165
  %442 = vmatprep.subr.mxu0 0.0
  %443 = vmatpush1.msra.mxu0 %v164
  %444 = vmatprep.subr.mxu0 0.0
  %445 = vmatpush1.msra.mxu0 %v163
  %446 = vmatprep.subr.mxu0 0.0
  %447 = vmatpush1.msra.mxu0 %v162
  %448 = vmatprep.subr.mxu0 0.0
  %449 = vmatpush1.msra.mxu0 %v161
  %450 = vmatprep.subr.mxu0 0.0
  %451 = vmatpush1.msra.mxu0 %v160
  %452 = vmatprep.subr.mxu0 0.0
  %453 = vmatpush1.msra.mxu0 %v159
  %454 = vmatprep.subr.mxu0 0.0
  %455 = vmatpush1.msra.mxu0 %v158
  %456 = vmatprep.subr.mxu0 0.0
  %457 = vmatpush1.msra.mxu0 %v157
  %458 = vmatprep.subr.mxu0 0.0
  %459 = vmatpush1.msra.mxu0 %v156
  %460 = vmatprep.subr.mxu0 0.0
  %461 = vmatpush1.msra.mxu0 %v155
  %462 = vmatprep.subr.mxu0 0.0
  %463 = vmatpush1.msra.mxu0 %v154
  %464 = vmatprep.subr.mxu0 0.0
  %465 = vmatpush1.msra.mxu0 %v153
  %466 = vmatprep.subr.mxu0 0.0
  %467 = vmatpush1.msra.mxu0 %v152
  %468 = vmatprep.subr.mxu0 0.0
  %469 = vmatpush1.msra.mxu0 %v151
  %470 = vmatprep.subr.mxu0 0.0
  %471 = vmatpush2.msra.mxu0 %v182
  %472 = vmatprep.subr.mxu0 0.0
  %473 = vmatpush2.msra.mxu0 %v181
  %474 = vmatprep.subr.mxu0 0.0
  %475 = vmatpush2.msra.mxu0 %v180
  %476 = vmatprep.subr.mxu0 0.0
  %477 = vmatpush2.msra.mxu0 %v179
  %478 = vmatprep.subr.mxu0 0.0
  %479 = vmatpush2.msra.mxu0 %v178
  %480 = vmatprep.subr.mxu0 0.0
  %481 = vmatpush2.msra.mxu0 %v177
  %482 = vmatprep.subr.mxu0 0.0
  %483 = vmatpush2.msra.mxu0 %v176
  %484 = vmatprep.subr.mxu0 0.0
  %485 = vmatpush2.msra.mxu0 %v175
  %486 = vmatprep.subr.mxu0 0.0
  %487 = vmatpush2.msra.mxu0 %v174
  %488 = vmatprep.subr.mxu0 0.0
  %489 = vmatpush2.msra.mxu0 %v173
  %490 = vmatprep.subr.mxu0 0.0
  %491 = vmatpush2.msra.mxu0 %v172
  %492 = vmatprep.subr.mxu0 0.0
  %493 = vmatpush2.msra.mxu0 %v171
  %494 = vmatprep.subr.mxu0 0.0
  %495 = vmatpush2.msra.mxu0 %v170
  %496 = vmatprep.subr.mxu0 0.0
  %497 = vmatpush2.msra.mxu0 %v169
  %498 = vmatprep.subr.mxu0 0.0
  %499 = vmatpush2.msra.mxu0 %v168
  %500 = vmatprep.subr.mxu0 0.0
  %501 = vmatpush2.msra.mxu0 %v167
  %502 = vmatprep.mubr.f32.mxu0 %v30
  %503 = vmatmul.mubr.f32.gmra.mxu0 %v29
  %v504 = vpop.f32.mrf.mxu0
  %v505 = vadd.f32 %v420, %v504
  %v506 = vpop.f32.mrf.mxu0
  %507 = vmatprep.mubr.f32.mxu0 %v38
  %508 = vmatmul.mubr.f32.gmra.mxu0 %v37
  %v509 = vpop.f32.mrf.mxu0
  %v510 = vadd.f32 %v425, %v509
  %v511 = vpop.f32.mrf.mxu0
  %512 = vmatprep.mubr.f32.mxu0 %v46
  %513 = vmatmul.mubr.f32.gmra.mxu0 %v45
  %v514 = vpop.f32.mrf.mxu0
  %v515 = vadd.f32 %v430, %v514
  %v516 = vpop.f32.mrf.mxu0
  %517 = vmatprep.mubr.f32.mxu0 %v54
  %518 = vmatmul.mubr.f32.gmra.mxu0 %v53
  %v519 = vpop.f32.mrf.mxu0
  %v520 = vadd.f32 %v435, %v519
  %v521 = vpop.f32.mrf.mxu0
  %522 = vdwg.mxu0
  %v523 = vmax.f32 %v505, 0.0
  %v524 = vmax.f32 %v510, 0.0
  %v525 = vmax.f32 %v515, 0.0
  %v526 = vmax.f32 %v520, 0.0
  %v527 = vld [vmem:[%s2] sm:$0xff]
  %v528 = vld [vmem:[%s2 + $0x8] sm:$0xff]
  %v529 = vld [vmem:[%s2 + $0x10] sm:$0xff]
  %v530 = vld [vmem:[%s2 + $0x18] sm:$0xff]
  %v531 = vld [vmem:[%s2 + $0x20] sm:$0xff]
  %v532 = vld [vmem:[%s2 + $0x28] sm:$0xff]
  %v533 = vld [vmem:[%s2 + $0x30] sm:$0xff]
  %v534 = vld [vmem:[%s2 + $0x38] sm:$0xff]
  %v535 = vld [vmem:[%s3] sm:$0x1]
  %v537 = vlaneseq
  %v538 = vshrl.u32 %v537, 7
  %v539 = vsub.s32 0, %v538
  %v540 = vrot.slane %v535, %v539
  %vm542 = vcmask 523264
  %v544 = vsel %vm542, %v523, 0
  %v547 = vsel %vm542, %v524, 0
  %v550 = vsel %vm542, %v525, 0
  %v553 = vsel %vm542, %v526, 0
  %555 = vmatprep.subr.mxu0 0.0
  %556 = vmatpush1.msra.mxu0 0.0
  %557 = vmatprep.subr.mxu0 0.0
  %558 = vmatpush1.msra.mxu0 0.0
  %559 = vmatprep.subr.mxu0 0.0
  %560 = vmatpush1.msra.mxu0 0.0
  %561 = vmatprep.subr.mxu0 0.0
  %562 = vmatpush1.msra.mxu0 0.0
  %563 = vmatprep.subr.mxu0 0.0
  %564 = vmatpush1.msra.mxu0 0.0
  %565 = vmatprep.subr.mxu0 0.0
  %566 = vmatpush1.msra.mxu0 0.0
  %567 = vmatprep.subr.mxu0 0.0
  %568 = vmatpush1.msra.mxu0 0.0
  %569 = vmatprep.subr.mxu0 0.0
  %570 = vmatpush1.msra.mxu0 0.0
  %571 = vmatprep.subr.mxu0 0.0
  %572 = vmatpush1.msra.mxu0 %v534
  %573 = vmatprep.subr.mxu0 0.0
  %574 = vmatpush1.msra.mxu0 %v533
  %575 = vmatprep.subr.mxu0 0.0
  %576 = vmatpush1.msra.mxu0 %v532
  %577 = vmatprep.subr.mxu0 0.0
  %578 = vmatpush1.msra.mxu0 %v531
  %579 = vmatprep.subr.mxu0 0.0
  %580 = vmatpush1.msra.mxu0 %v530
  %581 = vmatprep.subr.mxu0 0.0
  %582 = vmatpush1.msra.mxu0 %v529
  %583 = vmatprep.subr.mxu0 0.0
  %584 = vmatpush1.msra.mxu0 %v528
  %585 = vmatprep.subr.mxu0 0.0
  %586 = vmatpush1.msra.mxu0 %v527
  %587 = vmatprep.subr.mxu0 0.0
  %588 = vmatpush2.msra.mxu0 0.0
  %589 = vmatprep.subr.mxu0 0.0
  %590 = vmatpush2.msra.mxu0 0.0
  %591 = vmatprep.subr.mxu0 0.0
  %592 = vmatpush2.msra.mxu0 0.0
  %593 = vmatprep.subr.mxu0 0.0
  %594 = vmatpush2.msra.mxu0 0.0
  %595 = vmatprep.subr.mxu0 0.0
  %596 = vmatpush2.msra.mxu0 0.0
  %597 = vmatprep.subr.mxu0 0.0
  %598 = vmatpush2.msra.mxu0 0.0
  %599 = vmatprep.subr.mxu0 0.0
  %600 = vmatpush2.msra.mxu0 0.0
  %601 = vmatprep.subr.mxu0 0.0
  %602 = vmatpush2.msra.mxu0 0.0
  %603 = vmatprep.subr.mxu0 0.0
  %604 = vmatpush2.msra.mxu0 0.0
  %605 = vmatprep.subr.mxu0 0.0
  %606 = vmatpush2.msra.mxu0 0.0
  %607 = vmatprep.subr.mxu0 0.0
  %608 = vmatpush2.msra.mxu0 0.0
  %609 = vmatprep.subr.mxu0 0.0
  %610 = vmatpush2.msra.mxu0 0.0
  %611 = vmatprep.subr.mxu0 0.0
  %612 = vmatpush2.msra.mxu0 0.0
  %613 = vmatprep.subr.mxu0 0.0
  %614 = vmatpush2.msra.mxu0 0.0
  %615 = vmatprep.subr.mxu0 0.0
  %616 = vmatpush2.msra.mxu0 0.0
  %617 = vmatprep.subr.mxu0 0.0
  %618 = vmatpush2.msra.mxu0 0.0
  %619 = vmatprep.mubr.f32.mxu0 0.0
  %620 = vmatmul.mubr.f32.gmra.mxu0 %v544
  %v621 = vpop.f32.mrf.mxu0
  %v622 = vadd.f32 %v540, %v621
  %v623 = vpop.f32.mrf.mxu0
  %624 = vmatprep.mubr.f32.mxu0 0.0
  %625 = vmatmul.mubr.f32.gmra.mxu0 %v547
  %v626 = vpop.f32.mrf.mxu0
  %v627 = vadd.f32 %v540, %v626
  %v628 = vpop.f32.mrf.mxu0
  %629 = vmatprep.mubr.f32.mxu0 0.0
  %630 = vmatmul.mubr.f32.gmra.mxu0 %v550
  %v631 = vpop.f32.mrf.mxu0
  %v632 = vadd.f32 %v540, %v631
  %v633 = vpop.f32.mrf.mxu0
  %634 = vmatprep.mubr.f32.mxu0 0.0
  %635 = vmatmul.mubr.f32.gmra.mxu0 %v553
  %v636 = vpop.f32.mrf.mxu0
  %v637 = vadd.f32 %v540, %v636
  %v638 = vpop.f32.mrf.mxu0
  %639 = vdwg.mxu0
  %v640 = vld [vmem:[%s4] sm:$0xff]
  %v641 = vld [vmem:[%s4 + $0x8] sm:$0xff]
  %v642 = vld [vmem:[%s4 + $0x10] sm:$0xff]
  %v643 = vld [vmem:[%s4 + $0x18] sm:$0xff]
  %v644 = vld [vmem:[%s5] sm:$0x1]
  %v646 = vlaneseq
  %v647 = vshrl.u32 %v646, 7
  %v648 = vsub.s32 0, %v647
  %v649 = vrot.slane %v644, %v648
  %vm651 = vcmask 261120
  %v653 = vsel %vm651, %v622, 0
  %v656 = vsel %vm651, %v627, 0
  %v659 = vsel %vm651, %v632, 0
  %v662 = vsel %vm651, %v637, 0
  %664 = vmatprep.subr.mxu0 0.0
  %665 = vmatpush1.msra.mxu0 0.0
  %666 = vmatprep.subr.mxu0 0.0
  %667 = vmatpush1.msra.mxu0 0.0
  %668 = vmatprep.subr.mxu0 0.0
  %669 = vmatpush1.msra.mxu0 0.0
  %670 = vmatprep.subr.mxu0 0.0
  %671 = vmatpush1.msra.mxu0 0.0
  %672 = vmatprep.subr.mxu0 0.0
  %673 = vmatpush1.msra.mxu0 0.0
  %674 = vmatprep.subr.mxu0 0.0
  %675 = vmatpush1.msra.mxu0 0.0
  %676 = vmatprep.subr.mxu0 0.0
  %677 = vmatpush1.msra.mxu0 0.0
  %678 = vmatprep.subr.mxu0 0.0
  %679 = vmatpush1.msra.mxu0 0.0
  %680 = vmatprep.subr.mxu0 0.0
  %681 = vmatpush1.msra.mxu0 0.0
  %682 = vmatprep.subr.mxu0 0.0
  %683 = vmatpush1.msra.mxu0 0.0
  %684 = vmatprep.subr.mxu0 0.0
  %685 = vmatpush1.msra.mxu0 0.0
  %686 = vmatprep.subr.mxu0 0.0
  %687 = vmatpush1.msra.mxu0 0.0
  %688 = vmatprep.subr.mxu0 0.0
  %689 = vmatpush1.msra.mxu0 %v643
  %690 = vmatprep.subr.mxu0 0.0
  %691 = vmatpush1.msra.mxu0 %v642
  %692 = vmatprep.subr.mxu0 0.0
  %693 = vmatpush1.msra.mxu0 %v641
  %694 = vmatprep.subr.mxu0 0.0
  %695 = vmatpush1.msra.mxu0 %v640
  %696 = vmatprep.subr.mxu0 0.0
  %697 = vmatpush2.msra.mxu0 0.0
  %698 = vmatprep.subr.mxu0 0.0
  %699 = vmatpush2.msra.mxu0 0.0
  %700 = vmatprep.subr.mxu0 0.0
  %701 = vmatpush2.msra.mxu0 0.0
  %702 = vmatprep.subr.mxu0 0.0
  %703 = vmatpush2.msra.mxu0 0.0
  %704 = vmatprep.subr.mxu0 0.0
  %705 = vmatpush2.msra.mxu0 0.0
  %706 = vmatprep.subr.mxu0 0.0
  %707 = vmatpush2.msra.mxu0 0.0
  %708 = vmatprep.subr.mxu0 0.0
  %709 = vmatpush2.msra.mxu0 0.0
  %710 = vmatprep.subr.mxu0 0.0
  %711 = vmatpush2.msra.mxu0 0.0
  %712 = vmatprep.subr.mxu0 0.0
  %713 = vmatpush2.msra.mxu0 0.0
  %714 = vmatprep.subr.mxu0 0.0
  %715 = vmatpush2.msra.mxu0 0.0
  %716 = vmatprep.subr.mxu0 0.0
  %717 = vmatpush2.msra.mxu0 0.0
  %718 = vmatprep.subr.mxu0 0.0
  %719 = vmatpush2.msra.mxu0 0.0
  %720 = vmatprep.subr.mxu0 0.0
  %721 = vmatpush2.msra.mxu0 0.0
  %722 = vmatprep.subr.mxu0 0.0
  %723 = vmatpush2.msra.mxu0 0.0
  %724 = vmatprep.subr.mxu0 0.0
  %725 = vmatpush2.msra.mxu0 0.0
  %726 = vmatprep.subr.mxu0 0.0
  %727 = vmatpush2.msra.mxu0 0.0
  %728 = vmatprep.mubr.f32.mxu0 0.0
  %729 = vmatmul.mubr.f32.gmra.mxu0 %v653
  %v730 = vpop.f32.mrf.mxu0
  %v731 = vadd.f32 %v649, %v730
  %v732 = vpop.f32.mrf.mxu0
  %733 = vmatprep.mubr.f32.mxu0 0.0
  %734 = vmatmul.mubr.f32.gmra.mxu0 %v656
  %v735 = vpop.f32.mrf.mxu0
  %v736 = vadd.f32 %v649, %v735
  %v737 = vpop.f32.mrf.mxu0
  %738 = vmatprep.mubr.f32.mxu0 0.0
  %739 = vmatmul.mubr.f32.gmra.mxu0 %v659
  %v740 = vpop.f32.mrf.mxu0
  %v741 = vadd.f32 %v649, %v740
  %v742 = vpop.f32.mrf.mxu0
  %743 = vmatprep.mubr.f32.mxu0 0.0
  %744 = vmatmul.mubr.f32.gmra.mxu0 %v662
  %v745 = vpop.f32.mrf.mxu0
  %v746 = vadd.f32 %v649, %v745
  %v747 = vpop.f32.mrf.mxu0
  %748 = vdwg.mxu0
  %vm749 = vcmask 64512
  %750 = vst.msk [vmem:[%s6] sm:$0xff] %vm749, %v731
  %751 = vst.msk [vmem:[%s6 + $0x8] sm:$0xff] %vm749, %v736
  %752 = vst.msk [vmem:[%s6 + $0x10] sm:$0xff] %vm749, %v741
  %753 = vst.msk [vmem:[%s6 + $0x18] sm:$0xff] %vm749, %v746
  // Predicated region
  $region26: #{probex_forward.1} parent=0 // pred_check
    _
  $region27: #{probex_forward.1} parent=0 // pred_check_branch
    %755 = sbr.rel (0) target = $region29
  $region28: #{probex_forward.1} parent=0 // pred_region
    _
  $region29: #{probex_forward.1} parent=0 // pred_fallthru
    _
  // Predicated region
  $region30: #{probex_forward.1} parent=0 // pred_check
    _
  $region31: #{probex_forward.1} parent=0 // pred_check_branch
    %757 = sbr.rel (0) target = $region33
  $region32: #{probex_forward.1} parent=0 // pred_region
    _
  $region33: #{probex_forward.1} parent=0 // pred_fallthru
    _

</llo_original>
